<compile_context>
chip_gen: v6e
topology: v6e:2x2x1
jax: 0.10.0
libtpu: 0.0.40
codegen_flags: <defaults>
</compile_context>

<pallas_src>
import jax
import jax.numpy as jnp
from jax import lax
from jax.experimental import pallas as pl
from jax.experimental.pallas import tpu as pltpu


def _round_up(v, m):
    return -(-v // m) * m


# ---------------------------------------------------------------------------
# Kernels
# ---------------------------------------------------------------------------
def _quadratic_kernel_dense(x_ref, a_ref, o_ref):
    # x_ref: (B, S, T) batch block, a_ref: (T, T) pre-scaled A, o_ref: (1, B*S*S)
    x = x_ref[...]                                   # (B, S, T)
    a = a_ref[...]                                   # (T, T)
    B, S, T = x.shape

    # First matmul on the MXU with M = B*S (leading-dim merge is free: S = 8
    # equals the f32 sublane tile).
    xb = x.reshape(B * S, T)
    r1 = jnp.dot(xb, a, preferred_element_type=jnp.float32).reshape(B, S, T)

    # Second matmul: out[b] = r1[b] @ x[b]^T as a batched contraction on the
    # last dims (no explicit transpose).
    out = lax.dot_general(
        r1, x,
        dimension_numbers=(((2,), (2,)), ((0,), (0,))),
        preferred_element_type=jnp.float32,
    )                                                # (B, S, S)

    # Lane-dense store: relayout (B,S,S) -> (1, B*S*S) so the store and the
    # output writeback DMA are not 8-of-128-lane masked accesses.
    o_ref[...] = out.reshape(1, B * S * S).astype(o_ref.dtype)


def _quadratic_kernel_blocked(x_ref, a_ref, o_ref):
    # Fallback variant: identical math, direct (B, S, S) output block.
    x = x_ref[...]
    a = a_ref[...]
    B, S, T = x.shape
    xb = x.reshape(B * S, T)
    r1 = jnp.dot(xb, a, preferred_element_type=jnp.float32).reshape(B, S, T)
    out = lax.dot_general(
        r1, x,
        dimension_numbers=(((2,), (2,)), ((0,), (0,))),
        preferred_element_type=jnp.float32,
    )
    o_ref[...] = out.astype(o_ref.dtype)


# ---------------------------------------------------------------------------
# VMEM budgeting (padding-corrected, per TPU generation)
# ---------------------------------------------------------------------------
def _vmem_limits():
    """Returns (vmem_limit_bytes for CompilerParams, byte budget for blocks)."""
    try:
        physical = int(pltpu.get_tpu_info().vmem_capacity_bytes)
    except Exception:
        physical = 64 * 1024 * 1024          # conservative: v7x per-core VMEM
    limit = min(physical - 8 * 1024 * 1024, 112 * 1024 * 1024)
    limit = max(limit, 16 * 1024 * 1024)
    # Blocks are double-buffered and in-kernel values spill to VMEM; keep slack.
    return limit, limit // 2


def _step_bytes(B, S, T, in_itemsize, out_itemsize, dense_out):
    """Padded VMEM footprint of one grid step (double-buffered blocks + live values)."""
    sp = _round_up(S, 8)
    tp = _round_up(T, 128)
    x_blk = B * sp * tp * in_itemsize
    a_blk = _round_up(T, 8) * tp * in_itemsize
    if dense_out:
        o_blk = 8 * _round_up(B * S * S, 128) * out_itemsize   # (1, L): sublane pads to 8
    else:
        o_blk = B * sp * _round_up(S, 128) * out_itemsize      # minor S pads to 128
    pipelined = 2 * (x_blk + a_blk + o_blk)
    # In-kernel live values (x, r1, out, dense relayout copy), conservatively.
    live = (B * sp * tp * (in_itemsize + 4)
            + B * sp * _round_up(S, 128) * 4
            + _round_up(B * S * S, 128) * 4 * 8)
    return pipelined + live


def _pick_batch_block(N, S, T, in_itemsize, out_itemsize, budget, dense_out,
                      max_b=512):
    """Largest power-of-two B that fits the padded VMEM budget, keeps the grid
    >= 2 steps (v7x megacore), and stays under a hard cap (the batched second
    contraction unrolls over B, which trades compile time for per-step size)."""
    cap = max(1, min(max_b, -(-N // 2)))
    best, b = 1, 1
    while b <= cap:
        if _step_bytes(b, S, T, in_itemsize, out_itemsize, dense_out) <= budget:
            best = b
        b *= 2
    return best


# ---------------------------------------------------------------------------
# Wrapper
# ---------------------------------------------------------------------------
def quadratic(x, A, *, use_bf16_inputs=False):
    """x: (N, S, T), A: (T, T)  ->  (N, S, S) = (X A X^T) / sum(A)."""
    N, S, T = x.shape
    assert A.shape == (T, T)
    out_dtype = x.dtype

    # Hoist the normalization: X A X^T / sum(A) == X (A / sum(A)) X^T.
    # Scaling is done (and kept) in f32 so low-precision A does not lose bits.
    # TODO(synk): assumes sum(A) is not ~0 (true for the module's A ~ I init);
    # a near-zero sum would overflow inside the matmul instead of post-division.
    a_f32 = A.astype(jnp.float32)
    a_hat = a_f32 / jnp.sum(a_f32)

    if use_bf16_inputs:
        x_in, a_in = x.astype(jnp.bfloat16), a_hat.astype(jnp.bfloat16)
    else:
        x_in, a_in = x.astype(jnp.float32), a_hat

    in_itemsize = jnp.dtype(x_in.dtype).itemsize
    out_itemsize = jnp.dtype(out_dtype).itemsize
    vmem_limit, budget = _vmem_limits()

    def run(dense_out):
        B = _pick_batch_block(N, S, T, in_itemsize, out_itemsize, budget, dense_out)
        G = pl.cdiv(N, B)
        Np = G * B
        xp = x_in if Np == N else jnp.pad(x_in, ((0, Np - N), (0, 0), (0, 0)))

        params = pltpu.CompilerParams(
            dimension_semantics=("parallel",),
            vmem_limit_bytes=int(vmem_limit),
        )
        in_specs = [
            pl.BlockSpec((B, S, T), lambda g: (g, 0, 0)),
            pl.BlockSpec((T, T), lambda g: (0, 0)),
        ]

        if dense_out:
            out = pl.pallas_call(
                _quadratic_kernel_dense,
                out_shape=jax.ShapeDtypeStruct((G, B * S * S), out_dtype),
                grid_spec=pltpu.PrefetchScalarGridSpec(
                    num_scalar_prefetch=0,
                    grid=(G,),
                    in_specs=in_specs,
                    out_specs=pl.BlockSpec((1, B * S * S), lambda g: (g, 0)),
                ),
                compiler_params=params,
            )(xp, a_in)
            out = out.reshape(Np, S, S)       # free: row-major identical
        else:
            out = pl.pallas_call(
                _quadratic_kernel_blocked,
                out_shape=jax.ShapeDtypeStruct((Np, S, S), out_dtype),
                grid_spec=pltpu.PrefetchScalarGridSpec(
                    num_scalar_prefetch=0,
                    grid=(G,),
                    in_specs=in_specs,
                    out_specs=pl.BlockSpec((B, S, S), lambda g: (g, 0, 0)),
                ),
                compiler_params=params,
            )(xp, a_in)

        return out[:N] if Np != N else out

    try:
        # Primary: lane-dense flattened output (unmasked stores, dense writeback).
        return run(dense_out=True)
    except Exception:
        # Fallback: if this jax/Mosaic version cannot lower the in-kernel
        # (B,S,S)->(1,B*S*S) relayout, use the validated blocked-output layout.
        return run(dense_out=False)


if __name__ == "__main__":
    key = jax.random.PRNGKey(0)
    k_x, k_a, k_x2 = jax.random.split(key, 3)

    # Small shapes consistent with the module: input_shape = (S, T), batch N.
    N, S, T = 2, 8, 16
    eps = 0.1

    # Deterministic parameter init: A = I + eps * randn(T, T)  (as in __init__)
    A = jnp.eye(T, dtype=jnp.float32) + eps * jax.random.normal(
        k_a, (T, T), dtype=jnp.float32
    )
    x = jax.random.normal(k_x, (N, S, T), dtype=jnp.float32)

    out = jax.block_until_ready(quadratic(x, A))
    ref = jnp.einsum("nst,tu,nvu->nsv", x, A, x) / jnp.sum(A)
    assert out.shape == (N, S, S)
    assert jnp.allclose(out, ref, atol=1e-5, rtol=1e-5), (
        f"max err {jnp.max(jnp.abs(out - ref))}"
    )

    # Ragged batch (exercises the cdiv/padding path and B > 1).
    N2 = 5
    x2 = jax.random.normal(k_x2, (N2, S, T), dtype=jnp.float32)
    out2 = jax.block_until_ready(quadratic(x2, A))
    ref2 = jnp.einsum("nst,tu,nvu->nsv", x2, A, x2) / jnp.sum(A)
    assert out2.shape == (N2, S, S)
    assert jnp.allclose(out2, ref2, atol=1e-5, rtol=1e-5), (
        f"max err {jnp.max(jnp.abs(out2 - ref2))}"
    )

    print("KERNEL_OK")
</pallas_src>

<mosaic_0001>
module attributes {stable_mosaic.version = 11 : i64} {
  func.func @_quadratic_kernel_blocked(%arg0: i32, %arg1: memref<1x8x16xf32, #tpu.memory_space<vmem>>, %arg2: memref<16x16xf32, #tpu.memory_space<vmem>>, %arg3: memref<1x8x8xf32, #tpu.memory_space<vmem>>) attributes {dimension_semantics = [#tpu.dimension_semantics<parallel>], iteration_bounds = array<i64: 2>, scalar_prefetch = 0 : i64, scratch_operands = 0 : i64, tpu.core_type = #tpu.core_type<tc>, window_params = [{transform_indices = @transform_0, window_bounds = array<i64: 1, 8, 16>}, {pipeline_mode = #tpu.pipeline_mode<synchronous>, transform_indices = @transform_1, window_bounds = array<i64: 16, 16>}, {transform_indices = @transform_2, window_bounds = array<i64: 1, 8, 8>}]} {
    %c0 = arith.constant 0 : index
    %c0_0 = arith.constant 0 : index
    %c0_1 = arith.constant 0 : index
    %0 = vector.load %arg1[%c0, %c0_0, %c0_1] : memref<1x8x16xf32, #tpu.memory_space<vmem>>, vector<1x8x16xf32>
    %c0_2 = arith.constant 0 : index
    %c0_3 = arith.constant 0 : index
    %1 = vector.load %arg2[%c0_2, %c0_3] : memref<16x16xf32, #tpu.memory_space<vmem>>, vector<16x16xf32>
    %2 = vector.shape_cast %0 : vector<1x8x16xf32> to vector<8x16xf32>
    %cst = arith.constant dense<0.000000e+00> : vector<8x16xf32>
    %3 = tpu.matmul %2, %1, %cst {dimension_numbers = #tpu.dot_dimension_numbers<[1], [0], [0], [1], [0, 0, 1, 1], [], []>} : vector<8x16xf32>, vector<16x16xf32>, vector<8x16xf32> -> vector<8x16xf32>
    %4 = vector.shape_cast %3 : vector<8x16xf32> to vector<1x8x16xf32>
    %cst_4 = arith.constant dense<0.000000e+00> : vector<1x8x8xf32>
    %5 = tpu.matmul %4, %0, %cst_4 {dimension_numbers = #tpu.dot_dimension_numbers<[2], [2], [1], [1], [0, 0, 0, 1, 1, 1], [0], [0]>} : vector<1x8x16xf32>, vector<1x8x16xf32>, vector<1x8x8xf32> -> vector<1x8x8xf32>
    %c0_5 = arith.constant 0 : index
    %c0_6 = arith.constant 0 : index
    %c0_7 = arith.constant 0 : index
    %6 = vector.load %arg3[%c0_5, %c0_6, %c0_7] : memref<1x8x8xf32, #tpu.memory_space<vmem>>, vector<1x8x8xf32>
    tpu.vector_store %arg3[%c0_5, %c0_6, %c0_7], %5 {strides = array<i32>} : memref<1x8x8xf32, #tpu.memory_space<vmem>>, vector<1x8x8xf32>,
    return
  }
  func.func @transform_0(%arg0: i32) -> (i32, i32, i32) {
    %c0_i32 = arith.constant 0 : i32
    %c0_i32_0 = arith.constant 0 : i32
    %c0_i32_1 = arith.constant 0 : i32
    return %arg0, %c0_i32, %c0_i32_0 : i32, i32, i32
  }
  func.func @transform_1(%arg0: i32) -> (i32, i32) {
    %c0_i32 = arith.constant 0 : i32
    %c0_i32_0 = arith.constant 0 : i32
    %c0_i32_1 = arith.constant 0 : i32
    return %c0_i32, %c0_i32_0 : i32, i32
  }
  func.func @transform_2(%arg0: i32) -> (i32, i32, i32) {
    %c0_i32 = arith.constant 0 : i32
    %c0_i32_0 = arith.constant 0 : i32
    %c0_i32_1 = arith.constant 0 : i32
    return %arg0, %c0_i32, %c0_i32_0 : i32, i32, i32
  }
}

</mosaic_0001>

<llo_original>
// kernel: tpu_custom_call.1
$region0: #{tpu_custom_call.1}
  #allocation0 [shape = 'u32[]', space=smem, size = 0x4, offset = 0x4, fixed_abs, tag = 'smem constant byte address 0x4 - core index']
  #allocation1 [shape = 'u32[144,128]{1,0:T(1,128)}', space=vmem, size = 0x12000, scoped, tag = 'internal scratch']
  %s0 = inlined_call_operand.hbm [shape: f32[2,8,16], index: 0, kind: input, shape index: {}]
  %s1 = inlined_call_operand.hbm [shape: f32[16,16], index: 1, kind: input, shape index: {}]
  %s2 = inlined_call_operand.hbm [shape: f32[2,8,8], index: 2, kind: output, shape index: {}]
  %s3 = sld [smem:[#allocation0]]
  $region49: #{tpu_custom_call.1} parent=0
    _
  %s5 = ssub.s32 1, %s3
  %s6 = scalar_select 0, %s5, %s3
  $region1: #{tpu_custom_call.1} parent=0
    #allocation2 [shape = 'u8[8192]{0}', space=vmem, size = 0x2000, scoped, tag = 'input window, operand 0']
    #allocation3 [shape = 's32[2]{0}', space=sflag, size = 0x8, scoped, tag = 'scoped memory for tpu_custom_call.1']
    #allocation4 [shape = 's32[2]{0}', space=sflag, size = 0x8, scoped, tag = 'scoped memory for tpu_custom_call.1']
    #allocation5 [shape = 'u8[8192]{0}', space=vmem, size = 0x2000, scoped, tag = 'input window, operand 1, single buffered']
    #allocation6 [shape = 's32[1]{0}', space=sflag, size = 0x4, scoped, tag = 'scoped memory for tpu_custom_call.1']
    #allocation7 [shape = 'u8[8192]{0}', space=vmem, size = 0x2000, scoped, tag = 'output window, operand 0']
    %7 = vsyncpa [#allocation3], 0
    %s8 = scalar_lea.sflag [#allocation3], 1
    %9 = vsyncpa %s8, 0
    %10 = vsyncpa [#allocation6], 0
    %11 = vsyncpa [#allocation4], 0
    %s12 = scalar_lea.sflag [#allocation4], 1
    %13 = vsyncpa %s12, 0
    loop: start=0, step=1, limit=4
    $region2: #{tpu_custom_call.1} parent=1 // loop_pre_header
      _
    $region3: #{tpu_custom_call.1} parent=1 // loop_header
      %s15 = sphi 0, %s19
      %p16 = scmp.ge.s32.totalorder %s15, 4
      %s25 = sphi 0, %s27
      %s28 = sphi 0, %s25
      %s29 = sphi 0, %s28
      %s45 = sphi 0, %s29
      %s49 = sphi 0, %s49
      %s51 = sphi 0, %s49
      %s52 = sphi 0, %s51
      %s66 = sphi 0, %s52
      %s72 = sphi 0, %s74
      %s75 = sphi 0, %s72
      %s76 = sphi 0, %s75
      %s92 = sphi 0, %s76
    $region4: #{tpu_custom_call.1} parent=1 // loop_header_branch
      %18 = sbr.rel (%p16) target = $region8
    $region5: #{tpu_custom_call.1} parent=1 // loop_body
      %s20 = ssub.s32 %s15, 1
      %s21 = ssub.s32 %s15, 2
      %s22 = sadd.s32 %s15, 1
      %s23 = ssub.s32 %s15, %s22
      %p24 = scmp.eq.s32.totalorder %s23, 0
      %s26 = sadd.s32 %s25, 1
      %s27 = scalar_select %p24, %s25, %s26
      %p30 = pneg %p24
      %p31 = scmp.eq.s32.totalorder %s15, 1
      %p32 = por %p30, %p31
      %p33 = scmp.ne.s32.totalorder %s25, %s28
      %p34 = scmp.eq.s32.totalorder %s15, 0
      %p35 = por %p33, %p34
      %p36 = scmp.ne.s32.totalorder %s25, %s28
      %p37 = scmp.eq.s32.totalorder %s20, 1
      %p38 = por %p36, %p37
      %p39 = scmp.ne.s32.totalorder %s28, %s29
      %p40 = scmp.eq.s32.totalorder %s20, 0
      %p41 = por %p39, %p40
      %p42 = scmp.ne.s32.totalorder %s28, %s29
      %p43 = scmp.eq.s32.totalorder %s21, 1
      %p44 = por %p42, %p43
      %p46 = scmp.ne.s32.totalorder %s29, %s45
      %p47 = scmp.eq.s32.totalorder %s21, 0
      %p48 = por %p46, %p47
      %s50 = sadd.s32 %s49, 1
      %p53 = scmp.eq.s32.totalorder %s15, 1
      %p54 = scmp.ne.s32.totalorder %s49, %s51
      %p55 = scmp.eq.s32.totalorder %s15, 0
      %p56 = por %p54, %p55
      %p57 = scmp.ne.s32.totalorder %s49, %s51
      %p58 = scmp.eq.s32.totalorder %s20, 1
      %p59 = por %p57, %p58
      %p60 = scmp.ne.s32.totalorder %s51, %s52
      %p61 = scmp.eq.s32.totalorder %s20, 0
      %p62 = por %p60, %p61
      %p63 = scmp.ne.s32.totalorder %s51, %s52
      %p64 = scmp.eq.s32.totalorder %s21, 1
      %p65 = por %p63, %p64
      %p67 = scmp.ne.s32.totalorder %s52, %s66
      %p68 = scmp.eq.s32.totalorder %s21, 0
      %p69 = por %p67, %p68
      %s70 = ssub.s32 %s15, %s22
      %p71 = scmp.eq.s32.totalorder %s70, 0
      %s73 = sadd.s32 %s72, 1
      %s74 = scalar_select %p71, %s72, %s73
      %p77 = pneg %p71
      %p78 = scmp.eq.s32.totalorder %s15, 1
      %p79 = por %p77, %p78
      %p80 = scmp.ne.s32.totalorder %s72, %s75
      %p81 = scmp.eq.s32.totalorder %s15, 0
      %p82 = por %p80, %p81
      %p83 = scmp.ne.s32.totalorder %s72, %s75
      %p84 = scmp.eq.s32.totalorder %s20, 1
      %p85 = por %p83, %p84
      %p86 = scmp.ne.s32.totalorder %s75, %s76
      %p87 = scmp.eq.s32.totalorder %s20, 0
      %p88 = por %p86, %p87
      %p89 = scmp.ne.s32.totalorder %s75, %s76
      %p90 = scmp.eq.s32.totalorder %s21, 1
      %p91 = por %p89, %p90
      %p93 = scmp.ne.s32.totalorder %s76, %s92
      %p94 = scmp.eq.s32.totalorder %s21, 0
      %p95 = por %p93, %p94
      %p96 = scmp.le.s32.totalorder 1, %s15
      %p97 = scmp.lt.s32.totalorder %s15, 3
      %p98 = pnand %p96, %p97
      %p99 = pneg %p98
      // Predicated region
      $region9: #{tpu_custom_call.1} parent=5 // pred_check
        _
      $region10: #{tpu_custom_call.1} parent=5 // pred_check_branch
        %101 = sbr.rel (%p98) target = $region12
      $region11: #{tpu_custom_call.1} parent=5 // pred_region
        %s102 = ssub.s32 %s15, 1
        // Predicated region
        $region13: #{tpu_custom_call.1} parent=11 // pred_check
          %p103 = pneg %p62
        $region14: #{tpu_custom_call.1} parent=11 // pred_check_branch
          %105 = sbr.rel (%p103) target = $region16
        $region15: #{tpu_custom_call.1} parent=11 // pred_region
          %s107 = ssub.s32 256, 256
          %108 = vsyncadd [#allocation6], %s107
          %s109 = sshll.u32 [#allocation5], 4
          %s110 = int_to_ptr.vmem [resolvable:$true] %s109
          %115 = dma.hbm_to_vmem [thread:$0]  %s1, 256, %s110, [#allocation6], 128, 128, 8
        $region16: #{tpu_custom_call.1} parent=11 // pred_fallthru
          _
      $region12: #{tpu_custom_call.1} parent=5 // pred_fallthru
        _
      %p116 = scmp.lt.s32.totalorder %s15, 2
      // Predicated region
      $region17: #{tpu_custom_call.1} parent=5 // pred_check
        %p117 = pneg %p116
      $region18: #{tpu_custom_call.1} parent=5 // pred_check_branch
        %119 = sbr.rel (%p117) target = $region20
      $region19: #{tpu_custom_call.1} parent=5 // pred_region
        // Predicated region
        $region21: #{tpu_custom_call.1} parent=19 // pred_check
          %p120 = pneg %p35
        $region22: #{tpu_custom_call.1} parent=19 // pred_check_branch
          %122 = sbr.rel (%p120) target = $region24
        $region23: #{tpu_custom_call.1} parent=19 // pred_region
          %s123 = sand.u32 %s25, 1
          %s124 = scalar_lea.sflag [#allocation3], %s123
          %s125 = sand.u32 %s25, 1
          %s126 = smul.addr %s125, 8
          %s127 = scalar_lea.vmem [#allocation2], %s126
          %s129 = ssub.s32 128, 128
          %130 = vsyncadd %s124, %s129
          %s131 = smul.addr %s15, 128
          %s132 = scalar_lea.hbm %s0, %s131
          %s134 = sshll.u32 %s127, 4
          %s135 = int_to_ptr.vmem [resolvable:$true] %s134
          %137 = dma.hbm_to_vmem [thread:$0]  %s132, 128, %s135, %s124
        $region24: #{tpu_custom_call.1} parent=19 // pred_fallthru
          _
      $region20: #{tpu_custom_call.1} parent=5 // pred_fallthru
        _
      %p138 = scmp.le.s32.totalorder 1, %s15
      %p139 = scmp.lt.s32.totalorder %s15, 3
      %p140 = pnand %p138, %p139
      %p141 = pneg %p140
      // Predicated region
      $region25: #{tpu_custom_call.1} parent=5 // pred_check
        _
      $region26: #{tpu_custom_call.1} parent=5 // pred_check_branch
        %143 = sbr.rel (%p140) target = $region28
      $region27: #{tpu_custom_call.1} parent=5 // pred_region
        %s144 = ssub.s32 %s15, 1
        %s145 = sand.u32 %s28, 1
        %s146 = scalar_lea.sflag [#allocation3], %s145
        %s147 = sand.u32 %s28, 1
        %s148 = smul.addr %s147, 8
        %s149 = scalar_lea.vmem [#allocation2], %s148
        // Predicated region
        $region29: #{tpu_custom_call.1} parent=27 // pred_check
          %p150 = pneg %p41
        $region30: #{tpu_custom_call.1} parent=27 // pred_check_branch
          %152 = sbr.rel (%p150) target = $region32
        $region31: #{tpu_custom_call.1} parent=27 // pred_region
          %153 = dma.done %s146, 128
        $region32: #{tpu_custom_call.1} parent=27 // pred_fallthru
          _
        // Predicated region
        $region33: #{tpu_custom_call.1} parent=27 // pred_check
          %p154 = pneg %p62
        $region34: #{tpu_custom_call.1} parent=27 // pred_check_branch
          %156 = sbr.rel (%p154) target = $region36
        $region35: #{tpu_custom_call.1} parent=27 // pred_region
          %157 = dma.done [#allocation6], 256
        $region36: #{tpu_custom_call.1} parent=27 // pred_fallthru
          _
        %s158 = sand.u32 %s28, 1
        %s159 = scalar_lea.sflag [#allocation3], %s158
        %s160 = sand.u32 %s28, 1
        %s161 = smul.addr %s160, 8
        %s162 = scalar_lea.vmem [#allocation2], %s161
        %p163 = pneg %p41
        %p164 = pneg %p38
        %p165 = pneg %p62
        %p166 = pneg %p59
        %p167 = pneg %p88
        %p168 = pneg %p85
        %s169 = sand.u32 %s75, 1
        %s170 = scalar_lea.sflag [#allocation4], %s169
        %s171 = sand.u32 %s75, 1
        %s172 = smul.addr %s171, 8
        %s173 = scalar_lea.vmem [#allocation7], %s172
        %v174 = vld [vmem:[%s149] sm:$0xff]
        %v175 = vld [vmem:[#allocation5] sm:$0xff]
        %v176 = vld [vmem:[#allocation5 + $0x8] sm:$0xff]
        %vm177 = vcmask 130048
        %v179 = vsel %vm177, %v174, 0
        %181 = vmatprep.subr.mxu0 0.0
        %182 = vmatpush1.msra.mxu0 0.0
        %183 = vmatprep.subr.mxu0 0.0
        %184 = vmatpush1.msra.mxu0 0.0
        %185 = vmatprep.subr.mxu0 0.0
        %186 = vmatpush1.msra.mxu0 0.0
        %187 = vmatprep.subr.mxu0 0.0
        %188 = vmatpush1.msra.mxu0 0.0
        %189 = vmatprep.subr.mxu0 0.0
        %190 = vmatpush1.msra.mxu0 0.0
        %191 = vmatprep.subr.mxu0 0.0
        %192 = vmatpush1.msra.mxu0 0.0
        %193 = vmatprep.subr.mxu0 0.0
        %194 = vmatpush1.msra.mxu0 0.0
        %195 = vmatprep.subr.mxu0 0.0
        %196 = vmatpush1.msra.mxu0 0.0
        %197 = vmatprep.subr.mxu0 0.0
        %198 = vmatpush1.msra.mxu0 0.0
        %199 = vmatprep.subr.mxu0 0.0
        %200 = vmatpush1.msra.mxu0 0.0
        %201 = vmatprep.subr.mxu0 0.0
        %202 = vmatpush1.msra.mxu0 0.0
        %203 = vmatprep.subr.mxu0 0.0
        %204 = vmatpush1.msra.mxu0 0.0
        %205 = vmatprep.subr.mxu0 0.0
        %206 = vmatpush1.msra.mxu0 0.0
        %207 = vmatprep.subr.mxu0 0.0
        %208 = vmatpush1.msra.mxu0 0.0
        %209 = vmatprep.subr.mxu0 0.0
        %210 = vmatpush1.msra.mxu0 %v176
        %211 = vmatprep.subr.mxu0 0.0
        %212 = vmatpush1.msra.mxu0 %v175
        %213 = vmatprep.subr.mxu0 0.0
        %214 = vmatpush2.msra.mxu0 0.0
        %215 = vmatprep.subr.mxu0 0.0
        %216 = vmatpush2.msra.mxu0 0.0
        %217 = vmatprep.subr.mxu0 0.0
        %218 = vmatpush2.msra.mxu0 0.0
        %219 = vmatprep.subr.mxu0 0.0
        %220 = vmatpush2.msra.mxu0 0.0
        %221 = vmatprep.subr.mxu0 0.0
        %222 = vmatpush2.msra.mxu0 0.0
        %223 = vmatprep.subr.mxu0 0.0
        %224 = vmatpush2.msra.mxu0 0.0
        %225 = vmatprep.subr.mxu0 0.0
        %226 = vmatpush2.msra.mxu0 0.0
        %227 = vmatprep.subr.mxu0 0.0
        %228 = vmatpush2.msra.mxu0 0.0
        %229 = vmatprep.subr.mxu0 0.0
        %230 = vmatpush2.msra.mxu0 0.0
        %231 = vmatprep.subr.mxu0 0.0
        %232 = vmatpush2.msra.mxu0 0.0
        %233 = vmatprep.subr.mxu0 0.0
        %234 = vmatpush2.msra.mxu0 0.0
        %235 = vmatprep.subr.mxu0 0.0
        %236 = vmatpush2.msra.mxu0 0.0
        %237 = vmatprep.subr.mxu0 0.0
        %238 = vmatpush2.msra.mxu0 0.0
        %239 = vmatprep.subr.mxu0 0.0
        %240 = vmatpush2.msra.mxu0 0.0
        %241 = vmatprep.subr.mxu0 0.0
        %242 = vmatpush2.msra.mxu0 0.0
        %243 = vmatprep.subr.mxu0 0.0
        %244 = vmatpush2.msra.mxu0 0.0
        %245 = vmatprep.mubr.f32.mxu0 0.0
        %246 = vmatmul.mubr.f32.gmra.mxu0 %v179
        %v247 = vpop.f32.mrf.mxu0
        %v248 = vadd.f32 0.0, %v247
        %v249 = vpop.f32.mrf.mxu0
        %250 = vdwg.mxu0
        %v252 = vsel %vm177, %v248, 0
        %254 = vmatprep.subr.mxu0 0.0
        %255 = vmatpush1.xpose.msra.mxu0 0.0
        %256 = vmatprep.subr.mxu0 0.0
        %257 = vmatpush1.xpose.msra.mxu0 0.0
        %258 = vmatprep.subr.mxu0 0.0
        %259 = vmatpush1.xpose.msra.mxu0 0.0
        %260 = vmatprep.subr.mxu0 0.0
        %261 = vmatpush1.xpose.msra.mxu0 0.0
        %262 = vmatprep.subr.mxu0 0.0
        %263 = vmatpush1.xpose.msra.mxu0 0.0
        %264 = vmatprep.subr.mxu0 0.0
        %265 = vmatpush1.xpose.msra.mxu0 0.0
        %266 = vmatprep.subr.mxu0 0.0
        %267 = vmatpush1.xpose.msra.mxu0 0.0
        %268 = vmatprep.subr.mxu0 0.0
        %269 = vmatpush1.xpose.msra.mxu0 0.0
        %270 = vmatprep.subr.mxu0 0.0
        %271 = vmatpush1.xpose.msra.mxu0 0.0
        %272 = vmatprep.subr.mxu0 0.0
        %273 = vmatpush1.xpose.msra.mxu0 0.0
        %274 = vmatprep.subr.mxu0 0.0
        %275 = vmatpush1.xpose.msra.mxu0 0.0
        %276 = vmatprep.subr.mxu0 0.0
        %277 = vmatpush1.xpose.msra.mxu0 0.0
        %278 = vmatprep.subr.mxu0 0.0
        %279 = vmatpush1.xpose.msra.mxu0 0.0
        %280 = vmatprep.subr.mxu0 0.0
        %281 = vmatpush1.xpose.msra.mxu0 0.0
        %282 = vmatprep.subr.mxu0 0.0
        %283 = vmatpush1.xpose.msra.mxu0 0.0
        %284 = vmatprep.subr.mxu0 0.0
        %285 = vmatpush1.xpose.msra.mxu0 %v179
        %286 = vmatprep.subr.mxu0 0.0
        %287 = vmatpush2.xpose.msra.mxu0 0.0
        %288 = vmatprep.subr.mxu0 0.0
        %289 = vmatpush2.xpose.msra.mxu0 0.0
        %290 = vmatprep.subr.mxu0 0.0
        %291 = vmatpush2.xpose.msra.mxu0 0.0
        %292 = vmatprep.subr.mxu0 0.0
        %293 = vmatpush2.xpose.msra.mxu0 0.0
        %294 = vmatprep.subr.mxu0 0.0
        %295 = vmatpush2.xpose.msra.mxu0 0.0
        %296 = vmatprep.subr.mxu0 0.0
        %297 = vmatpush2.xpose.msra.mxu0 0.0
        %298 = vmatprep.subr.mxu0 0.0
        %299 = vmatpush2.xpose.msra.mxu0 0.0
        %300 = vmatprep.subr.mxu0 0.0
        %301 = vmatpush2.xpose.msra.mxu0 0.0
        %302 = vmatprep.subr.mxu0 0.0
        %303 = vmatpush2.xpose.msra.mxu0 0.0
        %304 = vmatprep.subr.mxu0 0.0
        %305 = vmatpush2.xpose.msra.mxu0 0.0
        %306 = vmatprep.subr.mxu0 0.0
        %307 = vmatpush2.xpose.msra.mxu0 0.0
        %308 = vmatprep.subr.mxu0 0.0
        %309 = vmatpush2.xpose.msra.mxu0 0.0
        %310 = vmatprep.subr.mxu0 0.0
        %311 = vmatpush2.xpose.msra.mxu0 0.0
        %312 = vmatprep.subr.mxu0 0.0
        %313 = vmatpush2.xpose.msra.mxu0 0.0
        %314 = vmatprep.subr.mxu0 0.0
        %315 = vmatpush2.xpose.msra.mxu0 0.0
        %316 = vmatprep.subr.mxu0 0.0
        %317 = vmatpush2.xpose.msra.mxu0 0.0
        %318 = vmatprep.mubr.f32.mxu0 0.0
        %319 = vmatmul.mubr.f32.gmra.mxu0 %v252
        %v320 = vpop.f32.mrf.mxu0
        %v321 = vadd.f32 0.0, %v320
        %v322 = vpop.f32.mrf.mxu0
        %323 = vdwg.mxu0
        %vm324 = vcmask 64512
        %325 = vst.msk [vmem:[%s173] sm:$0xff] %vm324, %v321
        %s326 = sand.u32 %s75, 1
        %s327 = scalar_lea.sflag [#allocation4], %s326
        %s328 = sand.u32 %s75, 1
        %s329 = smul.addr %s328, 8
        %s330 = scalar_lea.vmem [#allocation7], %s329
        // Predicated region
        $region37: #{tpu_custom_call.1} parent=27 // pred_check
          %p331 = pneg %p85
        $region38: #{tpu_custom_call.1} parent=27 // pred_check_branch
          %333 = sbr.rel (%p331) target = $region40
        $region39: #{tpu_custom_call.1} parent=27 // pred_region
          %s335 = ssub.s32 128, 128
          %336 = vsyncadd %s327, %s335
          %s337 = smul.addr %s20, 128
          %s338 = scalar_lea.hbm %s2, %s337
          %s340 = sshll.u32 %s330, 4
          %s341 = int_to_ptr.vmem [resolvable:$true] %s340
          %343 = dma.vmem_to_hbm [thread:$0]  %s341, 128, %s338, %s327
        $region40: #{tpu_custom_call.1} parent=27 // pred_fallthru
          _
      $region28: #{tpu_custom_call.1} parent=5 // pred_fallthru
        _
      %p344 = scmp.le.s32.totalorder 2, %s15
      // Predicated region
      $region41: #{tpu_custom_call.1} parent=5 // pred_check
        %p345 = pneg %p344
      $region42: #{tpu_custom_call.1} parent=5 // pred_check_branch
        %347 = sbr.rel (%p345) target = $region44
      $region43: #{tpu_custom_call.1} parent=5 // pred_region
        %s348 = ssub.s32 %s15, 2
        // Predicated region
        $region45: #{tpu_custom_call.1} parent=43 // pred_check
          %p349 = pneg %p91
        $region46: #{tpu_custom_call.1} parent=43 // pred_check_branch
          %351 = sbr.rel (%p349) target = $region48
        $region47: #{tpu_custom_call.1} parent=43 // pred_region
          %s352 = sand.u32 %s76, 1
          %s353 = scalar_lea.sflag [#allocation4], %s352
          %s354 = sand.u32 %s76, 1
          %s355 = smul.addr %s354, 8
          %s356 = scalar_lea.vmem [#allocation7], %s355
          %357 = dma.done %s353, 128
        $region48: #{tpu_custom_call.1} parent=43 // pred_fallthru
          _
      $region44: #{tpu_custom_call.1} parent=5 // pred_fallthru
        _
    $region6: #{tpu_custom_call.1} parent=1 // loop_footer
      %s19 = sadd.s32 1, %s15
    $region7: #{tpu_custom_call.1} parent=1 // loop_footer_branch
      %14 = sbr.rel target = $region3
    $region8: #{tpu_custom_call.1} parent=1 // loop_exit
      _
    %358 = vsyncpa [#allocation3], 1
    %s359 = scalar_lea.sflag [#allocation3], 1
    %360 = vsyncpa %s359, 1
    %361 = vsyncpa [#allocation6], 1
    %362 = vsyncpa [#allocation4], 1
    %s363 = scalar_lea.sflag [#allocation4], 1
    %364 = vsyncpa %s363, 1

</llo_original>
